<compile_context>
chip_gen: v7x
topology: tpu7x:2x2x1
jax: 0.10.0
libtpu: 0.0.40
codegen_flags: <defaults>
</compile_context>

<pallas_src>
import functools
import math

import jax
import jax.numpy as jnp
from jax.experimental import pallas as pl
from jax.experimental.pallas import tpu as pltpu


def _round_up(n, mult):
    return ((n + mult - 1) // mult) * mult


def _w_colnorm_kernel(w_ref, invwn_ref):
    """invwn[0, c] = 1 / max(||W[:, c]||, 1e-12) for one C tile."""
    w = w_ref[...].astype(jnp.float32)
    invwn_ref[...] = jax.lax.rsqrt(
        jnp.maximum(jnp.sum(w * w, axis=0, keepdims=True), 1e-24))


def _arc_kernel(x_ref, w_ref, invwn_ref, o_ref, rowsum_ref, *,
                scm, ssm, s, pad_c, unroll_d, use_bf16):
    p = pl.program_id(1)          # 0: accumulate row-sum, 1: finalize + store
    c = pl.program_id(2)

    x = x_ref[...].astype(jnp.float32)            # (Bt, D)
    w = w_ref[...].astype(jnp.float32)            # (D, Ct)

    # F.normalize(feature, dim=1) with the /10 cosine scale folded in (O(Bt*D)).
    inv_xn = jax.lax.rsqrt(
        jnp.maximum(jnp.sum(x * x, axis=1, keepdims=True), 1e-24))
    xn = x * (inv_xn * 0.1)

    # F.normalize(W, dim=0): column inverse norms are precomputed once by
    # _w_colnorm_kernel and streamed in as a (1, Ct) tile (hoisted out of the
    # B-tile / pass loops).
    wn = w * invwn_ref[...]

    if unroll_d:
        # Tiny D: VPU broadcast-MAC over D, skip the MXU push/pop entirely.
        D = xn.shape[1]
        cos = xn[:, 0:1] * wn[0:1, :]
        for d in range(1, D):
            cos = cos + xn[:, d:d + 1] * wn[d:d + 1, :]
    else:
        if use_bf16:
            cos = jnp.dot(xn.astype(jnp.bfloat16), wn.astype(jnp.bfloat16),
                          preferred_element_type=jnp.float32)
        else:
            cos = jnp.dot(xn, wn, preferred_element_type=jnp.float32)

    e_cos = jnp.exp(cos * s)                      # == exp(s * cos(a))

    @pl.when(jnp.logical_and(p == 0, c == 0))
    def _():
        rowsum_ref[...] = jnp.zeros_like(rowsum_ref)

    @pl.when(p == 0)
    def _():
        rowsum_ref[...] += jnp.sum(e_cos, axis=1, keepdims=True)

    @pl.when(p == 1)
    def _():
        # cos(a + m) = cos*cos(m) - sin(a)*sin(m),  sin(a) = sqrt(1 - cos^2)
        sin_a = jnp.sqrt(jnp.maximum(1.0 - cos * cos, 0.0))
        top_exp = cos * scm - sin_a * ssm         # == s * cos(a + m)
        top = jnp.exp(top_exp)
        # Padded W columns are exactly zero -> exp(s*cos) == 1.0 exactly, so
        # the valid-class row sum is the padded sum minus the pad count
        # (no iota/where mask needed).
        down2 = (rowsum_ref[...] - pad_c) - e_cos
        # log(top / (top + down2)) == top_exp - log(top + down2)
        o_ref[...] = top_exp - jnp.log(top + down2)


def pad_arc_classes(W):
    """Pad the class axis of W to a lane multiple ONCE (parameter-init time)."""
    D, C = W.shape
    Cp = _round_up(C, 128)
    if Cp != C:
        W = jnp.pad(W, ((0, 0), (0, Cp - C)))
    return W, C


def arc_forward(feature, w_padded, num_classes, m=1.0, s=10.0,
                use_bf16_matmul=False):
    """feature: (B, D) f32; w_padded: (D, Cp) f32 (Cp % 128 == 0) -> (B, C)."""
    B, D = feature.shape
    Dw, Cp = w_padded.shape
    C = num_classes
    assert Dw == D and Cp % 128 == 0 and Cp >= C

    # Tile sizes: batch sublane-aligned, classes lane-aligned (lane-dense vst).
    Bp = _round_up(B, 8)
    Bt = min(Bp, 256)
    Bp = _round_up(Bp, Bt)
    Ct = max(t for t in (512, 256, 128) if Cp % t == 0)
    nb, nc = Bp // Bt, Cp // Ct

    x_p = feature if Bp == B else jnp.pad(feature, ((0, Bp - B), (0, 0)))

    # Hoisted W column inverse norms: computed once per call, not per B tile.
    inv_wn = pl.pallas_call(
        _w_colnorm_kernel,
        out_shape=jax.ShapeDtypeStruct((1, Cp), jnp.float32),
        grid=(nc,),
        in_specs=[pl.BlockSpec((D, Ct), lambda c: (0, c))],
        out_specs=pl.BlockSpec((1, Ct), lambda c: (0, c)),
        compiler_params=pltpu.CompilerParams(
            dimension_semantics=("parallel",)),
    )(w_padded)

    kernel = functools.partial(
        _arc_kernel,
        scm=float(s * math.cos(m)),
        ssm=float(s * math.sin(m)),
        s=float(s),
        pad_c=float(Cp - C),
        unroll_d=(D <= 8),
        use_bf16=use_bf16_matmul,
    )

    cost = pl.CostEstimate(
        flops=2 * 2 * Bp * D * Cp,            # matmul runs in both passes
        transcendentals=5 * Bp * Cp,          # rsqrt/sqrt + 3 exp + 1 log
        bytes_accessed=4 * (2 * Bp * D + 2 * D * Cp + 2 * Cp + Bp * Cp),
    )

    out_p = pl.pallas_call(
        kernel,
        out_shape=jax.ShapeDtypeStruct((Bp, Cp), jnp.float32),
        grid=(nb, 2, nc),
        in_specs=[
            pl.BlockSpec((Bt, D), lambda b, p, c: (b, 0)),   # feature tile
            pl.BlockSpec((D, Ct), lambda b, p, c: (0, c)),   # W tile
            pl.BlockSpec((1, Ct), lambda b, p, c: (0, c)),   # 1/||W col||
        ],
        # During pass 0 the output block stays parked at (b, 0); every output
        # block is written exactly once (in pass 1) before its single
        # writeback, so no masked / duplicate HBM stores occur.
        out_specs=pl.BlockSpec((Bt, Ct), lambda b, p, c: (b, p * c)),
        scratch_shapes=[pltpu.VMEM((Bt, 1), jnp.float32)],
        compiler_params=pltpu.CompilerParams(
            dimension_semantics=("parallel", "arbitrary", "arbitrary"),
            vmem_limit_bytes=32 * 1024 * 1024),
        cost_estimate=cost,
    )(x_p, w_padded, inv_wn)

    if Bp == B and Cp == C:
        return out_p
    return out_p[:B, :C]


def arc_reference(feature, W, m=1.0, s=10.0):
    """Plain-JAX reference mirroring the PyTorch forward exactly."""
    x = feature / jnp.maximum(
        jnp.linalg.norm(feature, axis=1, keepdims=True), 1e-12)
    w = W / jnp.maximum(jnp.linalg.norm(W, axis=0, keepdims=True), 1e-12)
    cos = jnp.matmul(x, w) / 10.0
    a = jnp.arccos(cos)
    top = jnp.exp(s * jnp.cos(a + m))
    e = jnp.exp(s * jnp.cos(a))
    down2 = jnp.sum(e, axis=1, keepdims=True) - e
    return jnp.log(top / (top + down2))


if __name__ == "__main__":
    feature_dim = 2
    cls_dim = 10
    batch = 8

    key = jax.random.PRNGKey(0)
    k_feat, k_w = jax.random.split(key)
    # Deterministic "randn"-style init for the parameter W (feature_dim, cls_dim)
    W = jax.random.normal(k_w, (feature_dim, cls_dim), dtype=jnp.float32)
    feature = jax.random.normal(k_feat, (batch, feature_dim), dtype=jnp.float32)

    # Pad the class axis once, at parameter-creation time (not per forward).
    W_padded, num_classes = pad_arc_classes(W)

    out = arc_forward(feature, W_padded, num_classes, m=1.0, s=10.0)
    out = jax.block_until_ready(out)

    ref = arc_reference(feature, W, m=1.0, s=10.0)
    assert out.shape == (batch, cls_dim)
    assert jnp.allclose(out, ref, atol=1e-4, rtol=1e-4), (
        f"max abs diff {jnp.max(jnp.abs(out - ref))}")

    print("KERNEL_OK")
</pallas_src>

<mosaic_0001>
module attributes {stable_mosaic.version = 11 : i64} {
  func.func @_w_colnorm_kernel(%arg0: i32, %arg1: memref<2x128xf32, #tpu.memory_space<vmem>>, %arg2: memref<1x128xf32, #tpu.memory_space<vmem>>) attributes {dimension_semantics = [#tpu.dimension_semantics<parallel>], iteration_bounds = array<i64: 1>, scalar_prefetch = 0 : i64, scratch_operands = 0 : i64, tpu.core_type = #tpu.core_type<tc>, window_params = [{transform_indices = @transform_0, window_bounds = array<i64: 2, 128>}, {transform_indices = @transform_1, window_bounds = array<i64: 1, 128>}]} {
    %c0 = arith.constant 0 : index
    %c0_0 = arith.constant 0 : index
    %0 = vector.load %arg1[%c0, %c0_0] : memref<2x128xf32, #tpu.memory_space<vmem>>, vector<2x128xf32>
    %1 = arith.mulf %0, %0 : vector<2x128xf32>
    %cst = arith.constant dense<0.000000e+00> : vector<128xf32>
    %2 = vector.multi_reduction <add>, %1, %cst [0] : vector<2x128xf32> to vector<128xf32>
    %3 = vector.shape_cast %2 : vector<128xf32> to vector<1x128xf32>
    %cst_1 = arith.constant 1.000000e-24 : f32
    %4 = vector.broadcast %cst_1 : f32 to vector<1x128xf32>
    %5 = arith.maximumf %3, %4 : vector<1x128xf32>
    %6 = math.rsqrt %5 : vector<1x128xf32>
    %c0_2 = arith.constant 0 : index
    %c0_3 = arith.constant 0 : index
    %7 = vector.load %arg2[%c0_2, %c0_3] : memref<1x128xf32, #tpu.memory_space<vmem>>, vector<1x128xf32>
    tpu.vector_store %arg2[%c0_2, %c0_3], %6 {strides = array<i32>} : memref<1x128xf32, #tpu.memory_space<vmem>>, vector<1x128xf32>,
    return
  }
  func.func @transform_0(%arg0: i32) -> (i32, i32) {
    %c0_i32 = arith.constant 0 : i32
    %c0_i32_0 = arith.constant 0 : i32
    return %c0_i32, %arg0 : i32, i32
  }
  func.func @transform_1(%arg0: i32) -> (i32, i32) {
    %c0_i32 = arith.constant 0 : i32
    %c0_i32_0 = arith.constant 0 : i32
    return %c0_i32, %arg0 : i32, i32
  }
}

</mosaic_0001>

<llo_original>
// kernel: tpu_custom_call.1
$region0: #{tpu_custom_call.1}
  #allocation0 [shape = 'u32[]', space=smem, size = 0x4, offset = 0x4, fixed_abs, tag = 'smem constant byte address 0x4 - core index']
  #allocation1 [shape = 'u32[144,128]{1,0:T(1,128)}', space=vmem, size = 0x12000, scoped, tag = 'internal scratch']
  %s0 = inlined_call_operand.hbm [shape: f32[2,128], index: 0, kind: input, shape index: {}]
  %s1 = inlined_call_operand.hbm [shape: f32[1,128], index: 1, kind: output, shape index: {}]
  %s2 = sld [smem:[#allocation0]]
  $region18: #{tpu_custom_call.1} parent=0
    _
  %s4 = ssub.s32 1, %s2
  %s5 = scalar_select 0, %s4, %s2
  $region1: #{tpu_custom_call.1} parent=0
    #allocation2 [shape = 'u8[1024]{0}', space=vmem, size = 0x400, scoped, tag = 'input window, operand 0, single buffered']
    #allocation3 [shape = 's32[1]{0}', space=sflag, size = 0x4, scoped, tag = 'scoped memory for tpu_custom_call.1']
    #allocation4 [shape = 's32[1]{0}', space=sflag, size = 0x4, scoped, tag = 'scoped memory for tpu_custom_call.1']
    #allocation5 [shape = 'u8[512]{0}', space=vmem, size = 0x400, scoped, tag = 'output window, operand 0, single buffered']
    %6 = vsyncpa [#allocation3], 0
    %7 = vsyncpa [#allocation4], 0
    // Predicated region
    $region2: #{tpu_custom_call.1} parent=1 // pred_check
      _
    $region3: #{tpu_custom_call.1} parent=1 // pred_check_branch
      %9 = sbr.rel (0) target = $region5
    $region4: #{tpu_custom_call.1} parent=1 // pred_region
      %s11 = ssub.s32 32, 32
      %12 = vsyncadd [#allocation3], %s11
      %s14 = sshll.u32 [#allocation2], 4
      %s15 = int_to_ptr.vmem [resolvable:$true] %s14
      %17 = dma.hbm_to_vmem [thread:$0]  %s0, 32, %s15, [#allocation3]
    $region5: #{tpu_custom_call.1} parent=1 // pred_fallthru
      _
    // Predicated region
    $region6: #{tpu_custom_call.1} parent=1 // pred_check
      _
    $region7: #{tpu_custom_call.1} parent=1 // pred_check_branch
      %19 = sbr.rel (0) target = $region9
    $region8: #{tpu_custom_call.1} parent=1 // pred_region
      %20 = dma.done [#allocation3], 32
    $region9: #{tpu_custom_call.1} parent=1 // pred_fallthru
      _
    %v21 = vld [vmem:[#allocation2] sm:$0x3]
    %v22 = vmul.f32 %v21, %v21
    %vm23 = vcmask 1041408
    %v24 = vsel %vm23, %v22, 0.0
    %v25 = vrot.slane %v24, 4
    %v26 = vadd.f32 %v24, %v25
    %v27 = vrot.slane %v26, 2
    %v28 = vadd.f32 %v26, %v27
    %v29 = vrot.slane %v28, 1
    %v30 = vadd.f32 %v28, %v29
    %v31 = vmax.f32 %v30, 1e-24
    %v32 = vrsqrt.pop %v31
    %33 = vst [vmem:[#allocation5] sm:$0x1] %v32
    // Predicated region
    $region10: #{tpu_custom_call.1} parent=1 // pred_check
      _
    $region11: #{tpu_custom_call.1} parent=1 // pred_check_branch
      %35 = sbr.rel (0) target = $region13
    $region12: #{tpu_custom_call.1} parent=1 // pred_region
      %s37 = ssub.s32 16, 16
      %38 = vsyncadd [#allocation4], %s37
      %s40 = sshll.u32 [#allocation5], 4
      %s41 = int_to_ptr.vmem [resolvable:$true] %s40
      %43 = dma.vmem_to_hbm [thread:$0]  %s41, 16, %s1, [#allocation4]
    $region13: #{tpu_custom_call.1} parent=1 // pred_fallthru
      _
    // Predicated region
    $region14: #{tpu_custom_call.1} parent=1 // pred_check
      _
    $region15: #{tpu_custom_call.1} parent=1 // pred_check_branch
      %45 = sbr.rel (0) target = $region17
    $region16: #{tpu_custom_call.1} parent=1 // pred_region
      %46 = dma.done [#allocation4], 16
    $region17: #{tpu_custom_call.1} parent=1 // pred_fallthru
      _
    %47 = vsyncpa [#allocation3], 1
    %48 = vsyncpa [#allocation4], 1

</llo_original>
